<compile_context>
chip_gen: v7x
topology: tpu7x:2x2x1
jax: 0.10.0
libtpu: 0.0.40
codegen_flags: <defaults>
</compile_context>

<pallas_src>
import jax
import jax.numpy as jnp
import numpy as np
from jax.experimental import pallas as pl
from jax.experimental.pallas import tpu as pltpu

ACTION_SIZE = 4
MAZE_SHAPE = (7, 7)                         # maze.shape[0] * maze.shape[1] = 49
STATE_SIZE = MAZE_SHAPE[0] * MAZE_SHAPE[1]  # 49
IN_FEATURES = STATE_SIZE + ACTION_SIZE      # 53 (fan-in of fc1, for init bounds)
HIDDEN = 32
OUT_FEATURES = 1

_VMEM_SOFT_CAP = 32 * 1024 * 1024        # headroom under v7x's 64 MiB physical VMEM
_DEFAULT_SCOPED_VMEM = 14 * 1024 * 1024  # stay under v5e's 16 MiB default scoped limit
_MEGACORE_SPLIT_MIN_B = 512              # below this, 2-way split isn't worth a 2nd step


def _round_up(x: int, m: int) -> int:
    return ((x + m - 1) // m) * m


def _is_multi_tensorcore() -> bool:
    """v7x exposes 2 TensorCores per chip; shard the batch grid across them."""
    try:
        return "v7" in jax.devices()[0].device_kind.lower()
    except Exception:  # pragma: no cover - device query failure -> be conservative
        return False


def _vmem_bytes(tb: int, elem_bytes: int) -> int:
    """Pipelined-buffer VMEM for one batch tile.

    Both the (tb, 49) and (tb, 4) input blocks lane-pad to 128 lanes in VMEM
    (so `a` costs exactly as much as `s`), each double-buffered; the f32 fc1
    activation (tb, <=64) also pads to 128 lanes.
    """
    inputs = 2 * 2 * tb * 128 * elem_bytes
    hidden = tb * 128 * 4
    return inputs + hidden


def _choose_tile(B: int, block_b, elem_bytes: int):
    """Pick the batch tile (tb) and padded batch (b_pad)."""
    row_align = 16 if elem_bytes < 4 else 8   # bf16 packs 2 rows per sublane
    if block_b is None:
        block_b = 8192 if elem_bytes < 4 else 4096
    # Cap the tile so the double-buffered, lane-padded footprint stays in budget.
    while block_b > 256 and _vmem_bytes(_round_up(block_b, 128), elem_bytes) > _VMEM_SOFT_CAP:
        block_b //= 2
    if B <= block_b:
        if _is_multi_tensorcore() and B >= _MEGACORE_SPLIT_MIN_B:
            # >=2 grid steps so dimension_semantics=("parallel",) engages both TCs.
            tb = _round_up(pl.cdiv(B, 2), 128)
        else:
            tb = _round_up(B, row_align)      # single tile == full (padded) batch
    else:
        tb = _round_up(block_b, 128)          # multi-step: lane-aligned output blocks
    b_pad = _round_up(B, tb)
    return tb, b_pad


def _make_critic_kernel(n_critics: int):
    """Kernel for NC fused critics sharing one (tb, 32*NC) fc1."""

    def kernel(s_ref, a_ref, w1s_ref, w1a_ref, b1_ref, w2_ref, b2_ref, o_ref):
        # s_ref: (tb, 49), a_ref: (tb, 4)            -- f32 or bf16 (MXU operands)
        # w1s_ref: (49, 32*NC), w1a_ref: (4, 32*NC)  -- f32 or bf16 (MXU operands)
        # b1_ref: (1, 32*NC), w2_ref: (NC, 32*NC) block-diag rows, b2_ref: (NC, 1) -- f32
        # o_ref: (NC, tb) f32 -- batch on the lane axis (lane-dense store)

        # fc1 on the MXU, split into two dots to avoid the (B, 53) concat.
        # f32 accumulation regardless of operand dtype.
        h = jnp.dot(s_ref[...], w1s_ref[...], preferred_element_type=jnp.float32)
        h = h + jnp.dot(a_ref[...], w1a_ref[...], preferred_element_type=jnp.float32)
        h = jnp.maximum(h + b1_ref[...], 0.0)                 # (tb, 32*NC) f32

        # fc2 (32 -> 1, per critic) on the VPU: broadcast-multiply + lane reduce.
        # w2 rows are zero-masked outside each critic's 32-column block, so a
        # full-width multiply + full lane reduce gives each critic's value
        # without any mid-lane slicing.
        w2 = w2_ref[...]                                       # (NC, 32*NC) f32
        rows = [jnp.sum(h * w2[c:c + 1, :], axis=1) for c in range(n_critics)]
        v = rows[0][None, :] if n_critics == 1 else jnp.stack(rows, axis=0)
        o_ref[...] = (v + b2_ref[...]).astype(o_ref.dtype)     # (NC, tb)

    return kernel


def _critic_pallas(s, a, params, *, block_b=None):
    """Shared pallas_call wrapper. Returns a lane-dense (NC, b_pad) f32 value row."""
    w1_s, w1_a, b1, w2_rows, b2 = params
    n_critics = b2.shape[0]
    hidden_total = w1_s.shape[1]                 # 32 * n_critics
    B = s.shape[0]
    elem_bytes = jnp.dtype(s.dtype).itemsize

    tb, b_pad = _choose_tile(B, block_b, elem_bytes)
    if b_pad != B:                               # pad ragged batch so the grid divides
        s = jnp.pad(s, ((0, b_pad - B), (0, 0)))
        a = jnp.pad(a, ((0, b_pad - B), (0, 0)))
    grid = (b_pad // tb,)

    cparams = {"dimension_semantics": ("parallel",)}   # megacore batch sharding
    vmem_need = _vmem_bytes(tb, elem_bytes)
    if vmem_need > _DEFAULT_SCOPED_VMEM:
        # Explicit limit so large tiles don't trip v5e's 16 MiB default scoped VMEM;
        # capped well under v7x's 64 MiB physical.
        cparams["vmem_limit_bytes"] = int(min(2 * vmem_need, 48 * 1024 * 1024))

    return pl.pallas_call(
        _make_critic_kernel(n_critics),
        out_shape=jax.ShapeDtypeStruct((n_critics, b_pad), jnp.float32),
        grid=grid,
        in_specs=[
            pl.BlockSpec((tb, STATE_SIZE), lambda i: (i, 0)),       # s tile (pipelined)
            pl.BlockSpec((tb, ACTION_SIZE), lambda i: (i, 0)),      # a tile (pipelined)
            pl.BlockSpec((STATE_SIZE, hidden_total), lambda i: (0, 0)),   # VMEM-resident
            pl.BlockSpec((ACTION_SIZE, hidden_total), lambda i: (0, 0)),
            pl.BlockSpec((1, hidden_total), lambda i: (0, 0)),
            pl.BlockSpec((n_critics, hidden_total), lambda i: (0, 0)),
            pl.BlockSpec((n_critics, 1), lambda i: (0, 0)),
        ],
        out_specs=pl.BlockSpec((n_critics, tb), lambda i: (0, i)),  # lane-dense output
        compiler_params=pltpu.CompilerParams(**cparams),
    )(s, a, w1_s, w1_a, b1, w2_rows, b2)


def critic_forward(s, a, params, *, block_b=None):
    """CriticNet.forward: s (B, 49), a (B, 4) -> value (B, 1) float32."""
    B = s.shape[0]
    rows = _critic_pallas(s, a, params, block_b=block_b)     # (1, b_pad)
    return rows[0, :B].reshape(B, OUT_FEATURES)              # padded rows discarded


def critic_forward_twin(s, a, twin_params, *, block_b=None):
    """Fused SAC twin critics: one pallas_call, one HBM read of s/a.

    Returns (q1, q2), each (B, 1) float32."""
    B = s.shape[0]
    rows = _critic_pallas(s, a, twin_params, block_b=block_b)  # (2, b_pad)
    q = rows[:, :B]                                            # padded rows discarded
    return q[0].reshape(B, 1), q[1].reshape(B, 1)


def init_params(key, param_dtype=jnp.float32):
    """PyTorch nn.Linear-style init (uniform +/- 1/sqrt(fan_in)).

    fc1 weight is split into state/action halves (MXU operands, take param_dtype,
    bf16 recommended on all generations); fc2 weight becomes a (1, 32) f32 row and
    biases stay f32 (epilogue)."""
    k1, k2, k3, k4 = jax.random.split(key, 4)
    bound1 = 1.0 / np.sqrt(IN_FEATURES)
    bound2 = 1.0 / np.sqrt(HIDDEN)
    w1 = jax.random.uniform(k1, (IN_FEATURES, HIDDEN), jnp.float32, -bound1, bound1)
    b1 = jax.random.uniform(k2, (1, HIDDEN), jnp.float32, -bound1, bound1)
    w2 = jax.random.uniform(k3, (HIDDEN, OUT_FEATURES), jnp.float32, -bound2, bound2)
    b2 = jax.random.uniform(k4, (1, OUT_FEATURES), jnp.float32, -bound2, bound2)
    w1_s = w1[:STATE_SIZE].astype(param_dtype)      # (49, 32)
    w1_a = w1[STATE_SIZE:].astype(param_dtype)      # (4, 32)
    w2_rows = w2.T                                   # (1, 32) f32
    return w1_s, w1_a, b1, w2_rows, b2               # b2: (1, 1)


def fuse_twin_params(p1, p2):
    """Stack two critics' params for the fused twin-critic kernel."""
    w1_s = jnp.concatenate([p1[0], p2[0]], axis=1)           # (49, 64)
    w1_a = jnp.concatenate([p1[1], p2[1]], axis=1)           # (4, 64)
    b1 = jnp.concatenate([p1[2], p2[2]], axis=1)             # (1, 64)
    z = jnp.zeros_like(p1[3])                                 # (1, 32) f32
    w2_rows = jnp.concatenate(                                # (2, 64) block-diagonal
        [jnp.concatenate([p1[3], z], axis=1),
         jnp.concatenate([z, p2[3]], axis=1)], axis=0)
    b2 = jnp.concatenate([p1[4], p2[4]], axis=0)              # (2, 1)
    return w1_s, w1_a, b1, w2_rows, b2


def reference_forward(s, a, params):
    """Pure-JAX reference with identical math (split fc1, VPU-style fc2)."""
    w1_s, w1_a, b1, w2_rows, b2 = params
    h = (jnp.dot(s, w1_s, preferred_element_type=jnp.float32)
         + jnp.dot(a, w1_a, preferred_element_type=jnp.float32)
         + b1)
    h = jnp.maximum(h, 0.0)
    v = jnp.stack([jnp.sum(h * w2_rows[c], axis=1) for c in range(w2_rows.shape[0])],
                  axis=1)
    return v + b2.T                                            # (B, NC)


if __name__ == "__main__":
    key = jax.random.PRNGKey(0)
    kp, kp2, ks, ka = jax.random.split(key, 4)

    # --- Small demo batch (single-tile path), matching the module semantics.
    B = 8
    params = init_params(kp)
    s = jax.random.normal(ks, (B, STATE_SIZE), jnp.float32)    # flattened 7x7 maze state
    a = jax.random.normal(ka, (B, ACTION_SIZE), jnp.float32)   # action vector

    out = jax.block_until_ready(critic_forward(s, a, params))
    ref = reference_forward(s, a, params)
    assert out.shape == (B, OUT_FEATURES), out.shape
    np.testing.assert_allclose(np.asarray(out), np.asarray(ref), rtol=1e-5, atol=1e-5)

    # --- Multi-tile path: grid > 1, ragged batch padded, lane-dense output reassembled.
    B2 = 300
    s2 = jax.random.normal(jax.random.PRNGKey(1), (B2, STATE_SIZE), jnp.float32)
    a2 = jax.random.normal(jax.random.PRNGKey(2), (B2, ACTION_SIZE), jnp.float32)
    out2 = jax.block_until_ready(critic_forward(s2, a2, params, block_b=128))
    ref2 = reference_forward(s2, a2, params)
    np.testing.assert_allclose(np.asarray(out2), np.asarray(ref2), rtol=1e-5, atol=1e-5)

    # --- bf16 operand path (recommended default on v5e/v6e/v7x): bf16 into the MXU,
    #     f32 accumulate + f32 epilogue.  Inputs arrive already in bf16 (the wrapper
    #     never casts, to avoid an extra HBM pass).
    params_bf16 = init_params(kp, param_dtype=jnp.bfloat16)
    s2_bf, a2_bf = s2.astype(jnp.bfloat16), a2.astype(jnp.bfloat16)
    out_bf = jax.block_until_ready(critic_forward(s2_bf, a2_bf, params_bf16, block_b=128))
    ref_bf = reference_forward(s2_bf, a2_bf, params_bf16)
    np.testing.assert_allclose(np.asarray(out_bf), np.asarray(ref_bf), rtol=2e-2, atol=2e-2)

    # --- Fused SAC twin critics: one pallas_call, one HBM read of s/a.
    params_q2 = init_params(kp2)
    twin = fuse_twin_params(params, params_q2)
    B3 = 64
    s3 = jax.random.normal(jax.random.PRNGKey(3), (B3, STATE_SIZE), jnp.float32)
    a3 = jax.random.normal(jax.random.PRNGKey(4), (B3, ACTION_SIZE), jnp.float32)
    q1, q2 = jax.block_until_ready(critic_forward_twin(s3, a3, twin))
    ref_q1 = reference_forward(s3, a3, params)
    ref_q2 = reference_forward(s3, a3, params_q2)
    np.testing.assert_allclose(np.asarray(q1), np.asarray(ref_q1), rtol=1e-5, atol=1e-5)
    np.testing.assert_allclose(np.asarray(q2), np.asarray(ref_q2), rtol=1e-5, atol=1e-5)

    print("KERNEL_OK")
</pallas_src>

<mosaic_0001>
module attributes {stable_mosaic.version = 11 : i64} {
  func.func @kernel(%arg0: i32, %arg1: memref<8x49xf32, #tpu.memory_space<vmem>>, %arg2: memref<8x4xf32, #tpu.memory_space<vmem>>, %arg3: memref<49x32xf32, #tpu.memory_space<vmem>>, %arg4: memref<4x32xf32, #tpu.memory_space<vmem>>, %arg5: memref<1x32xf32, #tpu.memory_space<vmem>>, %arg6: memref<1x32xf32, #tpu.memory_space<vmem>>, %arg7: memref<1x1xf32, #tpu.memory_space<vmem>>, %arg8: memref<1x8xf32, #tpu.memory_space<vmem>>) attributes {dimension_semantics = [#tpu.dimension_semantics<parallel>], iteration_bounds = array<i64: 1>, scalar_prefetch = 0 : i64, scratch_operands = 0 : i64, tpu.core_type = #tpu.core_type<tc>, window_params = [{transform_indices = @transform_0, window_bounds = array<i64: 8, 49>}, {transform_indices = @transform_1, window_bounds = array<i64: 8, 4>}, {pipeline_mode = #tpu.pipeline_mode<synchronous>, transform_indices = @transform_2, window_bounds = array<i64: 49, 32>}, {pipeline_mode = #tpu.pipeline_mode<synchronous>, transform_indices = @transform_3, window_bounds = array<i64: 4, 32>}, {pipeline_mode = #tpu.pipeline_mode<synchronous>, transform_indices = @transform_4, window_bounds = array<i64: 1, 32>}, {pipeline_mode = #tpu.pipeline_mode<synchronous>, transform_indices = @transform_5, window_bounds = array<i64: 1, 32>}, {pipeline_mode = #tpu.pipeline_mode<synchronous>, transform_indices = @transform_6, window_bounds = array<i64: 1, 1>}, {transform_indices = @transform_7, window_bounds = array<i64: 1, 8>}]} {
    %c0 = arith.constant 0 : index
    %c0_0 = arith.constant 0 : index
    %0 = vector.load %arg1[%c0, %c0_0] : memref<8x49xf32, #tpu.memory_space<vmem>>, vector<8x49xf32>
    %c0_1 = arith.constant 0 : index
    %c0_2 = arith.constant 0 : index
    %1 = vector.load %arg3[%c0_1, %c0_2] : memref<49x32xf32, #tpu.memory_space<vmem>>, vector<49x32xf32>
    %cst = arith.constant dense<0.000000e+00> : vector<8x32xf32>
    %2 = tpu.matmul %0, %1, %cst {dimension_numbers = #tpu.dot_dimension_numbers<[1], [0], [0], [1], [0, 0, 1, 1], [], []>} : vector<8x49xf32>, vector<49x32xf32>, vector<8x32xf32> -> vector<8x32xf32>
    %c0_3 = arith.constant 0 : index
    %c0_4 = arith.constant 0 : index
    %3 = vector.load %arg2[%c0_3, %c0_4] : memref<8x4xf32, #tpu.memory_space<vmem>>, vector<8x4xf32>
    %c0_5 = arith.constant 0 : index
    %c0_6 = arith.constant 0 : index
    %4 = vector.load %arg4[%c0_5, %c0_6] : memref<4x32xf32, #tpu.memory_space<vmem>>, vector<4x32xf32>
    %cst_7 = arith.constant dense<0.000000e+00> : vector<8x32xf32>
    %5 = tpu.matmul %3, %4, %cst_7 {dimension_numbers = #tpu.dot_dimension_numbers<[1], [0], [0], [1], [0, 0, 1, 1], [], []>} : vector<8x4xf32>, vector<4x32xf32>, vector<8x32xf32> -> vector<8x32xf32>
    %6 = arith.addf %2, %5 : vector<8x32xf32>
    %c0_8 = arith.constant 0 : index
    %c0_9 = arith.constant 0 : index
    %7 = vector.load %arg5[%c0_8, %c0_9] : memref<1x32xf32, #tpu.memory_space<vmem>>, vector<1x32xf32>
    %8 = vector.broadcast %7 : vector<1x32xf32> to vector<8x32xf32>
    %9 = arith.addf %6, %8 : vector<8x32xf32>
    %cst_10 = arith.constant 0.000000e+00 : f32
    %10 = vector.broadcast %cst_10 : f32 to vector<8x32xf32>
    %11 = arith.maximumf %9, %10 : vector<8x32xf32>
    %c0_11 = arith.constant 0 : index
    %c0_12 = arith.constant 0 : index
    %12 = vector.load %arg6[%c0_11, %c0_12] : memref<1x32xf32, #tpu.memory_space<vmem>>, vector<1x32xf32>
    %13 = vector.broadcast %12 : vector<1x32xf32> to vector<8x32xf32>
    %14 = arith.mulf %11, %13 : vector<8x32xf32>
    %cst_13 = arith.constant dense<0.000000e+00> : vector<8xf32>
    %15 = vector.multi_reduction <add>, %14, %cst_13 [1] : vector<8x32xf32> to vector<8xf32>
    %16 = vector.shape_cast %15 : vector<8xf32> to vector<1x8xf32>
    %c0_14 = arith.constant 0 : index
    %c0_15 = arith.constant 0 : index
    %17 = vector.load %arg7[%c0_14, %c0_15] : memref<1x1xf32, #tpu.memory_space<vmem>>, vector<1x1xf32>
    %18 = vector.broadcast %17 : vector<1x1xf32> to vector<1x8xf32>
    %19 = arith.addf %16, %18 : vector<1x8xf32>
    %c0_16 = arith.constant 0 : index
    %c0_17 = arith.constant 0 : index
    %20 = vector.load %arg8[%c0_16, %c0_17] : memref<1x8xf32, #tpu.memory_space<vmem>>, vector<1x8xf32>
    tpu.vector_store %arg8[%c0_16, %c0_17], %19 {strides = array<i32>} : memref<1x8xf32, #tpu.memory_space<vmem>>, vector<1x8xf32>,
    return
  }
  func.func @transform_0(%arg0: i32) -> (i32, i32) {
    %c0_i32 = arith.constant 0 : i32
    %c0_i32_0 = arith.constant 0 : i32
    return %arg0, %c0_i32 : i32, i32
  }
  func.func @transform_1(%arg0: i32) -> (i32, i32) {
    %c0_i32 = arith.constant 0 : i32
    %c0_i32_0 = arith.constant 0 : i32
    return %arg0, %c0_i32 : i32, i32
  }
  func.func @transform_2(%arg0: i32) -> (i32, i32) {
    %c0_i32 = arith.constant 0 : i32
    %c0_i32_0 = arith.constant 0 : i32
    %c0_i32_1 = arith.constant 0 : i32
    return %c0_i32, %c0_i32_0 : i32, i32
  }
  func.func @transform_3(%arg0: i32) -> (i32, i32) {
    %c0_i32 = arith.constant 0 : i32
    %c0_i32_0 = arith.constant 0 : i32
    %c0_i32_1 = arith.constant 0 : i32
    return %c0_i32, %c0_i32_0 : i32, i32
  }
  func.func @transform_4(%arg0: i32) -> (i32, i32) {
    %c0_i32 = arith.constant 0 : i32
    %c0_i32_0 = arith.constant 0 : i32
    %c0_i32_1 = arith.constant 0 : i32
    return %c0_i32, %c0_i32_0 : i32, i32
  }
  func.func @transform_5(%arg0: i32) -> (i32, i32) {
    %c0_i32 = arith.constant 0 : i32
    %c0_i32_0 = arith.constant 0 : i32
    %c0_i32_1 = arith.constant 0 : i32
    return %c0_i32, %c0_i32_0 : i32, i32
  }
  func.func @transform_6(%arg0: i32) -> (i32, i32) {
    %c0_i32 = arith.constant 0 : i32
    %c0_i32_0 = arith.constant 0 : i32
    %c0_i32_1 = arith.constant 0 : i32
    return %c0_i32, %c0_i32_0 : i32, i32
  }
  func.func @transform_7(%arg0: i32) -> (i32, i32) {
    %c0_i32 = arith.constant 0 : i32
    %c0_i32_0 = arith.constant 0 : i32
    return %c0_i32, %arg0 : i32, i32
  }
}

</mosaic_0001>

<llo_original>
// kernel: tpu_custom_call.1
$region0: #{tpu_custom_call.1}
  #allocation0 [shape = 'u32[]', space=smem, size = 0x4, offset = 0x4, fixed_abs, tag = 'smem constant byte address 0x4 - core index']
  #allocation1 [shape = 'u32[144,128]{1,0:T(1,128)}', space=vmem, size = 0x12000, scoped, tag = 'internal scratch']
  #allocation2 [shape = 'f32[1,1]{1,0:T(1,128)S(1)}', space=vmem, size = 0x200, scoped, tag = 'scoped memory for tpu_custom_call.1']
  %s0 = inlined_call_operand.vmem [shape: f32[8,49], index: 0, kind: input, shape index: {}]
  %s1 = inlined_call_operand.vmem [shape: f32[8,4], index: 1, kind: input, shape index: {}]
  %s2 = inlined_call_operand.vmem [shape: f32[49,32], index: 2, kind: input, shape index: {}]
  %s3 = inlined_call_operand.vmem [shape: f32[4,32], index: 3, kind: input, shape index: {}]
  %s4 = inlined_call_operand.vmem [shape: f32[1,32], index: 4, kind: input, shape index: {}]
  %s5 = inlined_call_operand.vmem [shape: f32[1,32], index: 5, kind: input, shape index: {}]
  %s6 = inlined_call_operand.<no memory space> [shape: f32[1,1], index: 6, kind: input, shape index: {}]
  %s7 = inlined_call_operand.hbm [shape: f32[1,8], index: 7, kind: output, shape index: {}]
  %s8 = sld [smem:[#allocation0]]
  $region38: #{tpu_custom_call.1} parent=0
    _
  %s10 = ssub.s32 1, %s8
  %s11 = scalar_select 0, %s10, %s8
  %v12 = vstv %s6
  %13 = vst [vmem:[#allocation2] sm:$0x1] %v12
  $region1: #{tpu_custom_call.1} parent=0
    #allocation3 [shape = 'u8[512]{0}', space=vmem, size = 0x400, scoped, tag = 'output window, operand 0, single buffered']
    #allocation4 [shape = 's32[1]{0}', space=sflag, size = 0x4, scoped, tag = 'scoped memory for tpu_custom_call.1']
    %14 = vsyncpa [#allocation4], 0
    // Predicated region
    $region2: #{tpu_custom_call.1} parent=1 // pred_check
      _
    $region3: #{tpu_custom_call.1} parent=1 // pred_check_branch
      %16 = sbr.rel (0) target = $region5
    $region4: #{tpu_custom_call.1} parent=1 // pred_region
      _
    $region5: #{tpu_custom_call.1} parent=1 // pred_fallthru
      _
    // Predicated region
    $region6: #{tpu_custom_call.1} parent=1 // pred_check
      _
    $region7: #{tpu_custom_call.1} parent=1 // pred_check_branch
      %18 = sbr.rel (0) target = $region9
    $region8: #{tpu_custom_call.1} parent=1 // pred_region
      _
    $region9: #{tpu_custom_call.1} parent=1 // pred_fallthru
      _
    // Predicated region
    $region10: #{tpu_custom_call.1} parent=1 // pred_check
      _
    $region11: #{tpu_custom_call.1} parent=1 // pred_check_branch
      %20 = sbr.rel (0) target = $region13
    $region12: #{tpu_custom_call.1} parent=1 // pred_region
      _
    $region13: #{tpu_custom_call.1} parent=1 // pred_fallthru
      _
    // Predicated region
    $region14: #{tpu_custom_call.1} parent=1 // pred_check
      _
    $region15: #{tpu_custom_call.1} parent=1 // pred_check_branch
      %22 = sbr.rel (0) target = $region17
    $region16: #{tpu_custom_call.1} parent=1 // pred_region
      _
    $region17: #{tpu_custom_call.1} parent=1 // pred_fallthru
      _
    // Predicated region
    $region18: #{tpu_custom_call.1} parent=1 // pred_check
      _
    $region19: #{tpu_custom_call.1} parent=1 // pred_check_branch
      %24 = sbr.rel (0) target = $region21
    $region20: #{tpu_custom_call.1} parent=1 // pred_region
      _
    $region21: #{tpu_custom_call.1} parent=1 // pred_fallthru
      _
    // Predicated region
    $region22: #{tpu_custom_call.1} parent=1 // pred_check
      _
    $region23: #{tpu_custom_call.1} parent=1 // pred_check_branch
      %26 = sbr.rel (0) target = $region25
    $region24: #{tpu_custom_call.1} parent=1 // pred_region
      _
    $region25: #{tpu_custom_call.1} parent=1 // pred_fallthru
      _
    // Predicated region
    $region26: #{tpu_custom_call.1} parent=1 // pred_check
      _
    $region27: #{tpu_custom_call.1} parent=1 // pred_check_branch
      %28 = sbr.rel (0) target = $region29
    $region28: #{tpu_custom_call.1} parent=1 // pred_region
      _
    $region29: #{tpu_custom_call.1} parent=1 // pred_fallthru
      _
    %v29 = vld [vmem:[%s0] sm:$0xff]
    %v30 = vld [vmem:[%s2] sm:$0xff]
    %v31 = vld [vmem:[%s2 + $0x8] sm:$0xff]
    %v32 = vld [vmem:[%s2 + $0x10] sm:$0xff]
    %v33 = vld [vmem:[%s2 + $0x18] sm:$0xff]
    %v34 = vld [vmem:[%s2 + $0x20] sm:$0xff]
    %v35 = vld [vmem:[%s2 + $0x28] sm:$0xff]
    %v36 = vld [vmem:[%s2 + $0x30] sm:$0x1]
    %v37 = vld [vmem:[%s1] sm:$0xff]
    %v38 = vld [vmem:[%s3] sm:$0xf]
    %vm39 = vcmask 31744
    %v41 = vsel %vm39, %v37, 0
    %vm43 = vcmask 1043456
    %v45 = vsel %vm43, %v38, 0
    %47 = vmatprep.subr.mxu0 0.0
    %48 = vmatpush1.msra.mxu0 %v45
    %49 = vmatprep.subr.mxu0 0.0
    %50 = vmatpush1.msra.mxu0 0.0
    %51 = vmatprep.subr.mxu0 0.0
    %52 = vmatpush1.msra.mxu0 0.0
    %53 = vmatprep.subr.mxu0 0.0
    %54 = vmatpush1.msra.mxu0 0.0
    %55 = vmatprep.subr.mxu0 0.0
    %56 = vmatpush1.msra.mxu0 0.0
    %57 = vmatprep.subr.mxu0 0.0
    %58 = vmatpush1.msra.mxu0 0.0
    %59 = vmatprep.subr.mxu0 0.0
    %60 = vmatpush1.msra.mxu0 0.0
    %61 = vmatprep.subr.mxu0 0.0
    %62 = vmatpush1.msra.mxu0 0.0
    %63 = vmatprep.subr.mxu0 0.0
    %64 = vmatpush1.msra.mxu0 0.0
    %65 = vmatprep.subr.mxu0 0.0
    %66 = vmatpush1.msra.mxu0 0.0
    %67 = vmatprep.subr.mxu0 0.0
    %68 = vmatpush1.msra.mxu0 0.0
    %69 = vmatprep.subr.mxu0 0.0
    %70 = vmatpush1.msra.mxu0 0.0
    %71 = vmatprep.subr.mxu0 0.0
    %72 = vmatpush1.msra.mxu0 0.0
    %73 = vmatprep.subr.mxu0 0.0
    %74 = vmatpush1.msra.mxu0 0.0
    %75 = vmatprep.subr.mxu0 0.0
    %76 = vmatpush1.msra.mxu0 0.0
    %77 = vmatprep.subr.mxu0 0.0
    %78 = vmatpush1.msra.mxu0 0.0
    %79 = vmatprep.subr.mxu0 0.0
    %80 = vmatpush1.msra.mxu0 0.0
    %81 = vmatprep.subr.mxu0 0.0
    %82 = vmatpush1.msra.mxu0 0.0
    %83 = vmatprep.subr.mxu0 0.0
    %84 = vmatpush1.msra.mxu0 0.0
    %85 = vmatprep.subr.mxu0 0.0
    %86 = vmatpush1.msra.mxu0 0.0
    %87 = vmatprep.subr.mxu0 0.0
    %88 = vmatpush1.msra.mxu0 0.0
    %89 = vmatprep.subr.mxu0 0.0
    %90 = vmatpush1.msra.mxu0 0.0
    %91 = vmatprep.subr.mxu0 0.0
    %92 = vmatpush1.msra.mxu0 0.0
    %93 = vmatprep.subr.mxu0 0.0
    %94 = vmatpush1.msra.mxu0 0.0
    %95 = vmatprep.subr.mxu0 0.0
    %96 = vmatpush1.msra.mxu0 0.0
    %97 = vmatprep.subr.mxu0 0.0
    %98 = vmatpush1.msra.mxu0 0.0
    %99 = vmatprep.subr.mxu0 0.0
    %100 = vmatpush1.msra.mxu0 0.0
    %101 = vmatprep.subr.mxu0 0.0
    %102 = vmatpush1.msra.mxu0 0.0
    %103 = vmatprep.subr.mxu0 0.0
    %104 = vmatpush1.msra.mxu0 0.0
    %105 = vmatprep.subr.mxu0 0.0
    %106 = vmatpush1.msra.mxu0 0.0
    %107 = vmatprep.subr.mxu0 0.0
    %108 = vmatpush1.msra.mxu0 0.0
    %109 = vmatprep.subr.mxu0 0.0
    %110 = vmatpush1.msra.mxu0 0.0
    %111 = vmatprep.mubr.f32.mxu0 0.0
    %112 = vmatmul.mubr.f32.gmra.mrb[0].mxu0 %v41
    %v113 = vpop.f32.mrb[0].mxu0
    %v114 = vadd.f32 0.0, %v113
    %v115 = vpop.f32.mrb[0].mxu0
    %116 = vdwg.mxu0
    %vm117 = vcmask 400384
    %v119 = vsel %vm117, %v29, 0
    %vm121 = vcmask 1040384
    %v123 = vsel %vm121, %v36, 0
    %125 = vmatprep.subr.mxu0 0.0
    %126 = vmatpush1.msra.mxu0 %v30
    %127 = vmatprep.subr.mxu0 0.0
    %128 = vmatpush1.msra.mxu0 %v31
    %129 = vmatprep.subr.mxu0 0.0
    %130 = vmatpush1.msra.mxu0 %v32
    %131 = vmatprep.subr.mxu0 0.0
    %132 = vmatpush1.msra.mxu0 %v33
    %133 = vmatprep.subr.mxu0 0.0
    %134 = vmatpush1.msra.mxu0 %v34
    %135 = vmatprep.subr.mxu0 0.0
    %136 = vmatpush1.msra.mxu0 %v35
    %137 = vmatprep.subr.mxu0 0.0
    %138 = vmatpush1.msra.mxu0 %v123
    %139 = vmatprep.subr.mxu0 0.0
    %140 = vmatpush1.msra.mxu0 0.0
    %141 = vmatprep.subr.mxu0 0.0
    %142 = vmatpush1.msra.mxu0 0.0
    %143 = vmatprep.subr.mxu0 0.0
    %144 = vmatpush1.msra.mxu0 0.0
    %145 = vmatprep.subr.mxu0 0.0
    %146 = vmatpush1.msra.mxu0 0.0
    %147 = vmatprep.subr.mxu0 0.0
    %148 = vmatpush1.msra.mxu0 0.0
    %149 = vmatprep.subr.mxu0 0.0
    %150 = vmatpush1.msra.mxu0 0.0
    %151 = vmatprep.subr.mxu0 0.0
    %152 = vmatpush1.msra.mxu0 0.0
    %153 = vmatprep.subr.mxu0 0.0
    %154 = vmatpush1.msra.mxu0 0.0
    %155 = vmatprep.subr.mxu0 0.0
    %156 = vmatpush1.msra.mxu0 0.0
    %157 = vmatprep.subr.mxu0 0.0
    %158 = vmatpush1.msra.mxu0 0.0
    %159 = vmatprep.subr.mxu0 0.0
    %160 = vmatpush1.msra.mxu0 0.0
    %161 = vmatprep.subr.mxu0 0.0
    %162 = vmatpush1.msra.mxu0 0.0
    %163 = vmatprep.subr.mxu0 0.0
    %164 = vmatpush1.msra.mxu0 0.0
    %165 = vmatprep.subr.mxu0 0.0
    %166 = vmatpush1.msra.mxu0 0.0
    %167 = vmatprep.subr.mxu0 0.0
    %168 = vmatpush1.msra.mxu0 0.0
    %169 = vmatprep.subr.mxu0 0.0
    %170 = vmatpush1.msra.mxu0 0.0
    %171 = vmatprep.subr.mxu0 0.0
    %172 = vmatpush1.msra.mxu0 0.0
    %173 = vmatprep.subr.mxu0 0.0
    %174 = vmatpush1.msra.mxu0 0.0
    %175 = vmatprep.subr.mxu0 0.0
    %176 = vmatpush1.msra.mxu0 0.0
    %177 = vmatprep.subr.mxu0 0.0
    %178 = vmatpush1.msra.mxu0 0.0
    %179 = vmatprep.subr.mxu0 0.0
    %180 = vmatpush1.msra.mxu0 0.0
    %181 = vmatprep.subr.mxu0 0.0
    %182 = vmatpush1.msra.mxu0 0.0
    %183 = vmatprep.subr.mxu0 0.0
    %184 = vmatpush1.msra.mxu0 0.0
    %185 = vmatprep.subr.mxu0 0.0
    %186 = vmatpush1.msra.mxu0 0.0
    %187 = vmatprep.subr.mxu0 0.0
    %188 = vmatpush1.msra.mxu0 0.0
    %189 = vmatprep.mubr.f32.mxu0 0.0
    %190 = vmatmul.mubr.f32.gmra.mrb[0].mxu0 %v119
    %v191 = vpop.f32.mrb[0].mxu0
    %v192 = vadd.f32 %v114, %v191
    %v193 = vpop.f32.mrb[0].mxu0
    %194 = vdwg.mxu0
    %v195 = vld [vmem:[%s4] sm:$0x1]
    %v197 = vlaneseq
    %v198 = vshrl.u32 %v197, 7
    %v199 = vsub.s32 0, %v198
    %v200 = vrot.slane %v195, %v199
    %v202 = vadd.f32 %v192, %v200
    %v203 = vmax.f32 %v202, 0.0
    %v204 = vld [vmem:[%s5] sm:$0x1]
    %v206 = vlaneseq
    %v207 = vshrl.u32 %v206, 7
    %v208 = vsub.s32 0, %v207
    %v209 = vrot.slane %v204, %v208
    %v211 = vmul.f32 %v203, %v209
    %vm212 = vcmask 261120
    %v213 = vsel %vm212, %v211, 0.0
    %214 = vadd.xlane.f32.xlu0 %v213
    %v215 = vpop.xlane.xlu0 %214
    %v216 = vld [vmem:[#allocation2] sm:$0x1]
    %218 = vset.pattern.permute.xlu0 0
    %219 = vperm.xlu0 %218, %v216
    %v220 = vpop.permute.xlu0 %219
    %v222 = vlaneseq
    %v223 = vshrl.u32 %v222, 7
    %v224 = vsub.s32 0, %v223
    %v225 = vrot.slane %v220, %v224
    %v226 = vadd.f32 %v215, %v225
    %v228 = vlaneseq
    %v229 = vand.u32 %v228, 127
    %v230 = vlaneseq
    %v231 = vshrl.u32 %v230, 7
    %v232 = vsub.s32 %v229, %v231
    %v233 = vrot.slane %v226, %v232
    %vm235 = vcmask 57344
    %236 = vst.msk [vmem:[#allocation3] sm:$0x1] %vm235, %v233
    // Predicated region
    $region30: #{tpu_custom_call.1} parent=1 // pred_check
      _
    $region31: #{tpu_custom_call.1} parent=1 // pred_check_branch
      %238 = sbr.rel (0) target = $region33
    $region32: #{tpu_custom_call.1} parent=1 // pred_region
      %s240 = ssub.s32 16, 16
      %241 = vsyncadd [#allocation4], %s240
      %s243 = sshll.u32 [#allocation3], 4
      %s244 = int_to_ptr.vmem [resolvable:$true] %s243
      %246 = dma.vmem_to_hbm [thread:$0]  %s244, 16, %s7, [#allocation4]
    $region33: #{tpu_custom_call.1} parent=1 // pred_fallthru
      _
    // Predicated region
    $region34: #{tpu_custom_call.1} parent=1 // pred_check
      _
    $region35: #{tpu_custom_call.1} parent=1 // pred_check_branch
      %248 = sbr.rel (0) target = $region37
    $region36: #{tpu_custom_call.1} parent=1 // pred_region
      %249 = dma.done [#allocation4], 16
    $region37: #{tpu_custom_call.1} parent=1 // pred_fallthru
      _
    %250 = vsyncpa [#allocation4], 1

</llo_original>
